<compile_context>
chip_gen: v5e
topology: v5e:2x2
jax: 0.10.0
libtpu: 0.0.40
codegen_flags: <defaults>
</compile_context>

<pallas_src>
import jax
import jax.numpy as jnp
from jax.experimental import pallas as pl
from jax.experimental.pallas import tpu as pltpu

_HIDDEN = 4
_LANES = 128
_MAX_TILE_ROWS = 2048      # 2048 x 128 f32 = 1 MiB/block; ~4 MiB double-buffered
_MIN_PALLAS_ELEMS = 16384  # below this a fused XLA elementwise op is strictly faster


def _round_up(a, m):
    return ((a + m - 1) // m) * m


def _mlp_kernel(w1_ref, b1_ref, w2_ref, b2_ref, x_ref, o_ref):
    # x_ref / o_ref: (tile_rows, 128) f32 lane-dense tiles in VMEM.
    # w1_ref/b1_ref/w2_ref: (4,) f32 in SMEM; b2_ref: (1,) f32 in SMEM.
    x = x_ref[...]
    acc = jnp.full_like(x, b2_ref[0])            # start from layer-2 bias
    for j in range(_HIDDEN):                     # unrolled over 4 hidden units
        h = jnp.maximum(x * w1_ref[j] + b1_ref[j], 0.0)   # layer1 + ReLU
        acc = acc + h * w2_ref[j]                          # layer2 contraction
    o_ref[...] = jnp.maximum(acc, 0.0).astype(o_ref.dtype)  # final ReLU


def _mlp_jax(x_flat, w1_s, b1_s, w2_s, b2_s):
    """Fused pure-XLA elementwise evaluation (small batches / ragged tail)."""
    acc = jnp.full_like(x_flat, b2_s[0])
    for j in range(_HIDDEN):
        acc = acc + jnp.maximum(x_flat * w1_s[j] + b1_s[j], 0.0) * w2_s[j]
    return jnp.maximum(acc, 0.0)


def _run_pallas_bulk(x2d, w1_s, b1_s, w2_s, b2_s):
    """Run the kernel over a lane-dense (rows, 128) f32 slab."""
    rows = x2d.shape[0]

    if rows <= 8:
        # Single full-extent block (block shape == array shape is always legal).
        tile_rows = rows
    else:
        # Balanced tiling, rounded to the f32 sublane multiple (8); at least two
        # blocks so v7x's two TensorCores both get work ("parallel" semantics).
        num_tiles = max(pl.cdiv(rows, _MAX_TILE_ROWS), 2)
        tile_rows = min(_MAX_TILE_ROWS, _round_up(pl.cdiv(rows, num_tiles), 8))

    grid = (pl.cdiv(rows, tile_rows),)  # partial last block is masked by Pallas
    smem = pltpu.MemorySpace.SMEM

    return pl.pallas_call(
        _mlp_kernel,
        out_shape=jax.ShapeDtypeStruct((rows, _LANES), jnp.float32),
        grid=grid,
        in_specs=[
            pl.BlockSpec(memory_space=smem),                       # w1 (SMEM)
            pl.BlockSpec(memory_space=smem),                       # b1 (SMEM)
            pl.BlockSpec(memory_space=smem),                       # w2 (SMEM)
            pl.BlockSpec(memory_space=smem),                       # b2 (SMEM)
            pl.BlockSpec((tile_rows, _LANES), lambda i: (i, 0)),   # x tile
        ],
        out_specs=pl.BlockSpec((tile_rows, _LANES), lambda i: (i, 0)),
        compiler_params=pltpu.CompilerParams(
            dimension_semantics=("parallel",)),
    )(w1_s, b1_s, w2_s, b2_s, x2d)


def neural_net_forward(x, w1, b1, w2, b2, *, min_pallas_elems=_MIN_PALLAS_ELEMS):
    """Forward pass of NeuralNet.

    Args:
      x:  (B, 1) float32 input.
      w1: (4, 1) float32 — layer1.weight (PyTorch (out, in) layout).
      b1: (4,)   float32 — layer1.bias.
      w2: (1, 4) float32 — layer2.weight.
      b2: (1,)   float32 — layer2.bias.
      min_pallas_elems: batches smaller than this use a fused pure-JAX path
        (launch + layout plumbing would dominate). Set to 0 to force the kernel.

    Returns:
      (B, 1) float32 output.
    """
    B = x.shape[0]
    if B == 0:
        return jnp.zeros((0, 1), jnp.float32)

    # Flatten parameters to 1-D scalar vectors for SMEM.
    w1_s = w1.reshape(_HIDDEN).astype(jnp.float32)
    b1_s = b1.reshape(_HIDDEN).astype(jnp.float32)
    w2_s = w2.reshape(_HIDDEN).astype(jnp.float32)
    b2_s = b2.reshape(1).astype(jnp.float32)

    x_flat = x.reshape(-1).astype(jnp.float32)   # (B,) — metadata-only reshape

    # Small batch: fused XLA elementwise op beats any pallas_call launch.
    if B < min_pallas_elems:
        return _mlp_jax(x_flat, w1_s, b1_s, w2_s, b2_s).reshape(B, 1)

    B_bulk = (B // _LANES) * _LANES
    if B_bulk == 0:   # fewer than 128 elements but kernel forced
        return _mlp_jax(x_flat, w1_s, b1_s, w2_s, b2_s).reshape(B, 1)

    # Zero-copy lane-dense view of the 128-aligned bulk (no jnp.pad).
    x2d = x_flat[:B_bulk].reshape(B_bulk // _LANES, _LANES)
    out_bulk = _run_pallas_bulk(x2d, w1_s, b1_s, w2_s, b2_s).reshape(-1)

    if B_bulk == B:
        # Fast path: no pad, no slice, no concat — kernel traffic only.
        return out_bulk.reshape(B, 1)

    # Ragged tail (<= 127 elements): tiny fused-JAX compute, then stitch.
    # TODO(synk): a masked in-kernel store of the tail block would avoid the
    # concatenate copy entirely; not worth the complexity for <128 elements.
    out_tail = _mlp_jax(x_flat[B_bulk:], w1_s, b1_s, w2_s, b2_s)
    return jnp.concatenate([out_bulk, out_tail]).reshape(B, 1)


def _reference_forward(x, w1, b1, w2, b2):
    h = jnp.maximum(x @ w1.T + b1, 0.0)
    return jnp.maximum(h @ w2.T + b2, 0.0)


if __name__ == "__main__":
    key = jax.random.PRNGKey(0)
    kx, k1, k2, k3, k4 = jax.random.split(key, 5)

    # Deterministic parameter init mimicking nn.Linear's default
    # U(-1/sqrt(fan_in), 1/sqrt(fan_in)).
    bound1 = 1.0   # fan_in = 1
    w1 = jax.random.uniform(k1, (4, 1), jnp.float32, -bound1, bound1)
    b1 = jax.random.uniform(k2, (4,), jnp.float32, -bound1, bound1)
    bound2 = 0.5   # fan_in = 4 -> 1/sqrt(4)
    w2 = jax.random.uniform(k3, (1, 4), jnp.float32, -bound2, bound2)
    b2 = jax.random.uniform(k4, (1,), jnp.float32, -bound2, bound2)

    def check(B, **kw):
        x = jax.random.normal(kx, (B, 1), dtype=jnp.float32)
        out = jax.block_until_ready(neural_net_forward(x, w1, b1, w2, b2, **kw))
        ref = _reference_forward(x, w1, b1, w2, b2)
        assert out.shape == (B, 1)
        assert jnp.allclose(out, ref, atol=1e-5, rtol=1e-5)

    # 1) tiny batch -> pure-JAX small-batch fallback.
    check(8)
    # 2) 128-aligned batch, kernel forced -> zero-copy fast path, single block.
    check(256, min_pallas_elems=0)
    # 3) 128-aligned batch with rows not a multiple of tile_rows
    #    (rows=17 -> tile_rows=16, grid=2, masked partial last block).
    check(17 * 128, min_pallas_elems=0)
    # 4) ragged batch, kernel forced -> Pallas bulk + fused-JAX tail.
    check(1000, min_pallas_elems=0)
    # 5) empty batch edge case.
    assert neural_net_forward(jnp.zeros((0, 1), jnp.float32),
                              w1, b1, w2, b2).shape == (0, 1)

    print("KERNEL_OK")
</pallas_src>

<mosaic_0001>
module attributes {stable_mosaic.version = 11 : i64} {
  func.func @_mlp_kernel(%arg0: i32, %arg1: memref<4xf32, #tpu.memory_space<smem>>, %arg2: memref<4xf32, #tpu.memory_space<smem>>, %arg3: memref<4xf32, #tpu.memory_space<smem>>, %arg4: memref<1xf32, #tpu.memory_space<smem>>, %arg5: memref<2x128xf32, #tpu.memory_space<vmem>>, %arg6: memref<2x128xf32, #tpu.memory_space<vmem>>) attributes {dimension_semantics = [#tpu.dimension_semantics<parallel>], iteration_bounds = array<i64: 1>, scalar_prefetch = 0 : i64, scratch_operands = 0 : i64, tpu.core_type = #tpu.core_type<tc>, window_params = [{transform_indices = @transform_0, window_bounds = array<i64: 4>}, {transform_indices = @transform_1, window_bounds = array<i64: 4>}, {transform_indices = @transform_2, window_bounds = array<i64: 4>}, {transform_indices = @transform_3, window_bounds = array<i64: 1>}, {transform_indices = @transform_4, window_bounds = array<i64: 2, 128>}, {transform_indices = @transform_5, window_bounds = array<i64: 2, 128>}]} {
    %c0 = arith.constant 0 : index
    %c0_0 = arith.constant 0 : index
    %0 = vector.load %arg5[%c0, %c0_0] : memref<2x128xf32, #tpu.memory_space<vmem>>, vector<2x128xf32>
    %c0_1 = arith.constant 0 : index
    %1 = memref.load %arg4[%c0_1] : memref<1xf32, #tpu.memory_space<smem>>
    %2 = vector.broadcast %1 : f32 to vector<2x128xf32>
    %c0_2 = arith.constant 0 : index
    %3 = memref.load %arg1[%c0_2] : memref<4xf32, #tpu.memory_space<smem>>
    %4 = vector.broadcast %3 : f32 to vector<2x128xf32>
    %5 = arith.mulf %0, %4 : vector<2x128xf32>
    %c0_3 = arith.constant 0 : index
    %6 = memref.load %arg2[%c0_3] : memref<4xf32, #tpu.memory_space<smem>>
    %7 = vector.broadcast %6 : f32 to vector<2x128xf32>
    %8 = arith.addf %5, %7 : vector<2x128xf32>
    %cst = arith.constant 0.000000e+00 : f32
    %9 = vector.broadcast %cst : f32 to vector<2x128xf32>
    %10 = arith.maximumf %8, %9 : vector<2x128xf32>
    %c0_4 = arith.constant 0 : index
    %11 = memref.load %arg3[%c0_4] : memref<4xf32, #tpu.memory_space<smem>>
    %12 = vector.broadcast %11 : f32 to vector<2x128xf32>
    %13 = arith.mulf %10, %12 : vector<2x128xf32>
    %14 = arith.addf %2, %13 : vector<2x128xf32>
    %c1 = arith.constant 1 : index
    %15 = memref.load %arg1[%c1] : memref<4xf32, #tpu.memory_space<smem>>
    %16 = vector.broadcast %15 : f32 to vector<2x128xf32>
    %17 = arith.mulf %0, %16 : vector<2x128xf32>
    %c1_5 = arith.constant 1 : index
    %18 = memref.load %arg2[%c1_5] : memref<4xf32, #tpu.memory_space<smem>>
    %19 = vector.broadcast %18 : f32 to vector<2x128xf32>
    %20 = arith.addf %17, %19 : vector<2x128xf32>
    %cst_6 = arith.constant 0.000000e+00 : f32
    %21 = vector.broadcast %cst_6 : f32 to vector<2x128xf32>
    %22 = arith.maximumf %20, %21 : vector<2x128xf32>
    %c1_7 = arith.constant 1 : index
    %23 = memref.load %arg3[%c1_7] : memref<4xf32, #tpu.memory_space<smem>>
    %24 = vector.broadcast %23 : f32 to vector<2x128xf32>
    %25 = arith.mulf %22, %24 : vector<2x128xf32>
    %26 = arith.addf %14, %25 : vector<2x128xf32>
    %c2 = arith.constant 2 : index
    %27 = memref.load %arg1[%c2] : memref<4xf32, #tpu.memory_space<smem>>
    %28 = vector.broadcast %27 : f32 to vector<2x128xf32>
    %29 = arith.mulf %0, %28 : vector<2x128xf32>
    %c2_8 = arith.constant 2 : index
    %30 = memref.load %arg2[%c2_8] : memref<4xf32, #tpu.memory_space<smem>>
    %31 = vector.broadcast %30 : f32 to vector<2x128xf32>
    %32 = arith.addf %29, %31 : vector<2x128xf32>
    %cst_9 = arith.constant 0.000000e+00 : f32
    %33 = vector.broadcast %cst_9 : f32 to vector<2x128xf32>
    %34 = arith.maximumf %32, %33 : vector<2x128xf32>
    %c2_10 = arith.constant 2 : index
    %35 = memref.load %arg3[%c2_10] : memref<4xf32, #tpu.memory_space<smem>>
    %36 = vector.broadcast %35 : f32 to vector<2x128xf32>
    %37 = arith.mulf %34, %36 : vector<2x128xf32>
    %38 = arith.addf %26, %37 : vector<2x128xf32>
    %c3 = arith.constant 3 : index
    %39 = memref.load %arg1[%c3] : memref<4xf32, #tpu.memory_space<smem>>
    %40 = vector.broadcast %39 : f32 to vector<2x128xf32>
    %41 = arith.mulf %0, %40 : vector<2x128xf32>
    %c3_11 = arith.constant 3 : index
    %42 = memref.load %arg2[%c3_11] : memref<4xf32, #tpu.memory_space<smem>>
    %43 = vector.broadcast %42 : f32 to vector<2x128xf32>
    %44 = arith.addf %41, %43 : vector<2x128xf32>
    %cst_12 = arith.constant 0.000000e+00 : f32
    %45 = vector.broadcast %cst_12 : f32 to vector<2x128xf32>
    %46 = arith.maximumf %44, %45 : vector<2x128xf32>
    %c3_13 = arith.constant 3 : index
    %47 = memref.load %arg3[%c3_13] : memref<4xf32, #tpu.memory_space<smem>>
    %48 = vector.broadcast %47 : f32 to vector<2x128xf32>
    %49 = arith.mulf %46, %48 : vector<2x128xf32>
    %50 = arith.addf %38, %49 : vector<2x128xf32>
    %cst_14 = arith.constant 0.000000e+00 : f32
    %51 = vector.broadcast %cst_14 : f32 to vector<2x128xf32>
    %52 = arith.maximumf %50, %51 : vector<2x128xf32>
    %c0_15 = arith.constant 0 : index
    %c0_16 = arith.constant 0 : index
    %53 = vector.load %arg6[%c0_15, %c0_16] : memref<2x128xf32, #tpu.memory_space<vmem>>, vector<2x128xf32>
    tpu.vector_store %arg6[%c0_15, %c0_16], %52 {strides = array<i32>} : memref<2x128xf32, #tpu.memory_space<vmem>>, vector<2x128xf32>,
    return
  }
  func.func @transform_0(%arg0: i32) -> i32 {
    %c0_i32 = arith.constant 0 : i32
    %c0_i32_0 = arith.constant 0 : i32
    return %c0_i32 : i32
  }
  func.func @transform_1(%arg0: i32) -> i32 {
    %c0_i32 = arith.constant 0 : i32
    %c0_i32_0 = arith.constant 0 : i32
    return %c0_i32 : i32
  }
  func.func @transform_2(%arg0: i32) -> i32 {
    %c0_i32 = arith.constant 0 : i32
    %c0_i32_0 = arith.constant 0 : i32
    return %c0_i32 : i32
  }
  func.func @transform_3(%arg0: i32) -> i32 {
    %c0_i32 = arith.constant 0 : i32
    %c0_i32_0 = arith.constant 0 : i32
    return %c0_i32 : i32
  }
  func.func @transform_4(%arg0: i32) -> (i32, i32) {
    %c0_i32 = arith.constant 0 : i32
    %c0_i32_0 = arith.constant 0 : i32
    return %arg0, %c0_i32 : i32, i32
  }
  func.func @transform_5(%arg0: i32) -> (i32, i32) {
    %c0_i32 = arith.constant 0 : i32
    %c0_i32_0 = arith.constant 0 : i32
    return %arg0, %c0_i32 : i32, i32
  }
}

</mosaic_0001>

<llo_original>
// kernel: tpu_custom_call.1
$region0: #{tpu_custom_call.1}
  #allocation0 [shape = 'u32[]', space=smem, size = 0x4, offset = 0x4, fixed_abs, tag = 'smem constant byte address 0x4 - core index']
  #allocation1 [shape = 'u32[72,128]{1,0:T(1,128)}', space=vmem, size = 0x9000, scoped, tag = 'internal scratch']
  #allocation2 [shape = 'f32[1]{0:T(128)S(6)}', space=smem, size = 0x200, scoped, tag = 'scoped memory for tpu_custom_call.1']
  %s0 = inlined_call_operand.vmem [shape: f32[4], index: 0, kind: input, shape index: {}]
  %s1 = inlined_call_operand.hbm [shape: f32[4], index: 1, kind: input, shape index: {}]
  %s2 = inlined_call_operand.hbm [shape: f32[4], index: 2, kind: input, shape index: {}]
  %s3 = inlined_call_operand.<no memory space> [shape: f32[1], index: 3, kind: input, shape index: {}]
  %s4 = inlined_call_operand.vmem [shape: f32[2,128], index: 4, kind: input, shape index: {}]
  %s5 = inlined_call_operand.hbm [shape: f32[2,128], index: 5, kind: output, shape index: {}]
  %s6 = sld [smem:[#allocation0]]
  $region42: #{tpu_custom_call.1} parent=0
    _
  %s8 = ssub.s32 1, %s6
  %s9 = scalar_select 0, %s8, %s6
  %10 = sst [smem:[#allocation2]] %s3
  $region1: #{tpu_custom_call.1} parent=0
    #allocation3 [shape = 'u8[512]{0}', space=smem, size = 0x200, scoped, tag = 'input window, operand 0, single buffered']
    #allocation4 [shape = 's32[1]{0}', space=sflag, size = 0x4, scoped, tag = 'scoped memory for tpu_custom_call.1']
    #allocation5 [shape = 's32[1]{0}', space=sflag, size = 0x4, scoped, tag = 'scoped memory for tpu_custom_call.1']
    #allocation6 [shape = 's32[1]{0}', space=sflag, size = 0x4, scoped, tag = 'scoped memory for tpu_custom_call.1']
    #allocation7 [shape = 'u8[512]{0}', space=smem, size = 0x200, scoped, tag = 'input window, operand 1, single buffered']
    #allocation8 [shape = 'u8[512]{0}', space=smem, size = 0x200, scoped, tag = 'input window, operand 2, single buffered']
    #allocation9 [shape = 's32[1]{0}', space=sflag, size = 0x4, scoped, tag = 'scoped memory for tpu_custom_call.1']
    #allocation10 [shape = 'u8[1024]{0}', space=vmem, size = 0x400, scoped, tag = 'output window, operand 0, single buffered']
    %11 = vsyncpa [#allocation6], 0
    %12 = vsyncpa [#allocation5], 0
    %13 = vsyncpa [#allocation9], 0
    %14 = vsyncpa [#allocation4], 0
    // Predicated region
    $region2: #{tpu_custom_call.1} parent=1 // pred_check
      _
    $region3: #{tpu_custom_call.1} parent=1 // pred_check_branch
      %16 = sbr.rel (0) target = $region5
    $region4: #{tpu_custom_call.1} parent=1 // pred_region
      %18 = vsyncadd [#allocation6], 0
      %s20 = sshll.u32 %s0, 4
      %s21 = int_to_ptr.vmem [resolvable:$true] %s20
      %23 = dma.vmem_to_smem %s21, 16, [#allocation3], [#allocation6]
    $region5: #{tpu_custom_call.1} parent=1 // pred_fallthru
      _
    // Predicated region
    $region6: #{tpu_custom_call.1} parent=1 // pred_check
      _
    $region7: #{tpu_custom_call.1} parent=1 // pred_check_branch
      %25 = sbr.rel (0) target = $region9
    $region8: #{tpu_custom_call.1} parent=1 // pred_region
      %27 = vsyncadd [#allocation5], 0
      %s29 = sshll.u32 %s1, 4
      %s30 = int_to_ptr.hbm [resolvable:$true] %s29
      %32 = dma.hbm_to_smem %s30, 16, [#allocation7], [#allocation5]
    $region9: #{tpu_custom_call.1} parent=1 // pred_fallthru
      _
    // Predicated region
    $region10: #{tpu_custom_call.1} parent=1 // pred_check
      _
    $region11: #{tpu_custom_call.1} parent=1 // pred_check_branch
      %34 = sbr.rel (0) target = $region13
    $region12: #{tpu_custom_call.1} parent=1 // pred_region
      %36 = vsyncadd [#allocation9], 0
      %s38 = sshll.u32 %s2, 4
      %s39 = int_to_ptr.hbm [resolvable:$true] %s38
      %41 = dma.hbm_to_smem %s39, 16, [#allocation8], [#allocation9]
    $region13: #{tpu_custom_call.1} parent=1 // pred_fallthru
      _
    // Predicated region
    $region14: #{tpu_custom_call.1} parent=1 // pred_check
      _
    $region15: #{tpu_custom_call.1} parent=1 // pred_check_branch
      %43 = sbr.rel (0) target = $region17
    $region16: #{tpu_custom_call.1} parent=1 // pred_region
      _
    $region17: #{tpu_custom_call.1} parent=1 // pred_fallthru
      _
    // Predicated region
    $region18: #{tpu_custom_call.1} parent=1 // pred_check
      _
    $region19: #{tpu_custom_call.1} parent=1 // pred_check_branch
      %45 = sbr.rel (0) target = $region21
    $region20: #{tpu_custom_call.1} parent=1 // pred_region
      _
    $region21: #{tpu_custom_call.1} parent=1 // pred_fallthru
      _
    // Predicated region
    $region22: #{tpu_custom_call.1} parent=1 // pred_check
      _
    $region23: #{tpu_custom_call.1} parent=1 // pred_check_branch
      %47 = sbr.rel (0) target = $region25
    $region24: #{tpu_custom_call.1} parent=1 // pred_region
      %49 = dma.done [#allocation6], 16
    $region25: #{tpu_custom_call.1} parent=1 // pred_fallthru
      _
    // Predicated region
    $region26: #{tpu_custom_call.1} parent=1 // pred_check
      _
    $region27: #{tpu_custom_call.1} parent=1 // pred_check_branch
      %51 = sbr.rel (0) target = $region29
    $region28: #{tpu_custom_call.1} parent=1 // pred_region
      %53 = dma.done [#allocation5], 16
    $region29: #{tpu_custom_call.1} parent=1 // pred_fallthru
      _
    // Predicated region
    $region30: #{tpu_custom_call.1} parent=1 // pred_check
      _
    $region31: #{tpu_custom_call.1} parent=1 // pred_check_branch
      %55 = sbr.rel (0) target = $region33
    $region32: #{tpu_custom_call.1} parent=1 // pred_region
      %57 = dma.done [#allocation9], 16
    $region33: #{tpu_custom_call.1} parent=1 // pred_fallthru
      _
    %58 = sfence
    %v59 = vld [vmem:[%s4] sm:$0x3]
    %s60 = sld [smem:[#allocation2]]
    %v61 = vstv %s60
    %s62 = sld [smem:[#allocation3]]
    %v63 = vstv %s62
    %v64 = vmul.f32 %v59, %v63
    %s65 = sld [smem:[#allocation7]]
    %v66 = vstv %s65
    %v67 = vadd.f32 %v64, %v66
    %v68 = vmax.f32 %v67, 0.0
    %s69 = sld [smem:[#allocation8]]
    %v70 = vstv %s69
    %v71 = vmul.f32 %v68, %v70
    %v72 = vadd.f32 %v61, %v71
    %s73 = sld [smem:[#allocation3 + $0x1]]
    %v74 = vstv %s73
    %v75 = vmul.f32 %v59, %v74
    %s76 = sld [smem:[#allocation7 + $0x1]]
    %v77 = vstv %s76
    %v78 = vadd.f32 %v75, %v77
    %v79 = vmax.f32 %v78, 0.0
    %s80 = sld [smem:[#allocation8 + $0x1]]
    %v81 = vstv %s80
    %v82 = vmul.f32 %v79, %v81
    %v83 = vadd.f32 %v72, %v82
    %s84 = sld [smem:[#allocation3 + $0x2]]
    %v85 = vstv %s84
    %v86 = vmul.f32 %v59, %v85
    %s87 = sld [smem:[#allocation7 + $0x2]]
    %v88 = vstv %s87
    %v89 = vadd.f32 %v86, %v88
    %v90 = vmax.f32 %v89, 0.0
    %s91 = sld [smem:[#allocation8 + $0x2]]
    %v92 = vstv %s91
    %v93 = vmul.f32 %v90, %v92
    %v94 = vadd.f32 %v83, %v93
    %s95 = sld [smem:[#allocation3 + $0x3]]
    %v96 = vstv %s95
    %v97 = vmul.f32 %v59, %v96
    %s98 = sld [smem:[#allocation7 + $0x3]]
    %v99 = vstv %s98
    %v100 = vadd.f32 %v97, %v99
    %v101 = vmax.f32 %v100, 0.0
    %s102 = sld [smem:[#allocation8 + $0x3]]
    %v103 = vstv %s102
    %v104 = vmul.f32 %v101, %v103
    %v105 = vadd.f32 %v94, %v104
    %v106 = vmax.f32 %v105, 0.0
    %107 = vst [vmem:[#allocation10] sm:$0x3] %v106
    // Predicated region
    $region34: #{tpu_custom_call.1} parent=1 // pred_check
      _
    $region35: #{tpu_custom_call.1} parent=1 // pred_check_branch
      %109 = sbr.rel (0) target = $region37
    $region36: #{tpu_custom_call.1} parent=1 // pred_region
      %111 = vsyncadd [#allocation4], 0
      %s113 = sshll.u32 [#allocation10], 4
      %s114 = int_to_ptr.vmem [resolvable:$true] %s113
      %s115 = sshll.u32 %s5, 4
      %s116 = int_to_ptr.hbm [resolvable:$true] %s115
      %118 = dma.vmem_to_hbm [thread:$0]  %s114, 32, %s116, [#allocation4]
    $region37: #{tpu_custom_call.1} parent=1 // pred_fallthru
      _
    // Predicated region
    $region38: #{tpu_custom_call.1} parent=1 // pred_check
      _
    $region39: #{tpu_custom_call.1} parent=1 // pred_check_branch
      %120 = sbr.rel (0) target = $region41
    $region40: #{tpu_custom_call.1} parent=1 // pred_region
      %122 = dma.done [#allocation4], 32
    $region41: #{tpu_custom_call.1} parent=1 // pred_fallthru
      _
    %123 = vsyncpa [#allocation4], 1
    %124 = vsyncpa [#allocation5], 1
    %125 = vsyncpa [#allocation9], 1
    %126 = vsyncpa [#allocation6], 1

</llo_original>
